<compile_context>
chip_gen: v6e
topology: v6e:2x2x1
jax: 0.10.0
libtpu: 0.0.40
codegen_flags: <defaults>
</compile_context>

<pallas_src>
import functools

import jax
import jax.numpy as jnp
from jax.experimental import pallas as pl
from jax.experimental.pallas import tpu as pltpu

IN_FEATURES = 4
HIDDEN = 128
OUT_FEATURES = 2
OUT_PAD = 128  # lane-dense padded output width


def _round_up(x, m):
    return (x + m - 1) // m * m


def _soft_q_kernel(x_ref,
                   w1_ref, b1_ref,
                   w2_ref, b2_ref,
                   w3_ref, b3_ref,
                   w4_ref, b4_ref,
                   w5_ref, b5_ref,
                   out_ref):
    """Fused MLP forward for one (TM, IN_FEATURES) batch tile."""
    x = x_ref[...].astype(jnp.float32)                 # (TM, 4)
    w1 = w1_ref[...].astype(jnp.float32)               # (4, 128)

    # Layer 1: K=4 contraction as a 4-term VPU broadcast-FMA (f32).  A K=4 MXU
    # pass would waste almost the whole systolic array; the VPU does this in a
    # handful of bundles and leaves the MXU free for the 128x128 layers.
    acc = x[:, 0:1] * w1[0:1, :]
    for k in range(1, IN_FEATURES):
        acc = acc + x[:, k:k + 1] * w1[k:k + 1, :]
    h = jnp.maximum(acc + b1_ref[...].astype(jnp.float32), 0.0)

    def dense(a, w_ref, b_ref):
        # MXU matmul in the weights' dtype (f32 or bf16), f32 accumulation;
        # bias-add stays in f32 on the VPU.
        y = jnp.dot(a.astype(w_ref.dtype), w_ref[...],
                    preferred_element_type=jnp.float32)
        return y + b_ref[...].astype(jnp.float32)

    h = jnp.maximum(dense(h, w2_ref, b2_ref), 0.0)
    h = jnp.maximum(dense(h, w3_ref, b3_ref), 0.0)
    h = jnp.maximum(dense(h, w4_ref, b4_ref), 0.0)
    q = dense(h, w5_ref, b5_ref)                       # (TM, OUT_PAD)
    out_ref[...] = q.astype(out_ref.dtype)             # full-width unmasked vst


@functools.partial(jax.jit, static_argnames=("compute_dtype", "tile_m"))
def soft_q_forward(state, params, *, compute_dtype=jnp.float32, tile_m=512):
    """state: (B, IN_FEATURES) float32.  params: dict of f32 weights/biases.

    compute_dtype: dtype for the 128x128 MXU layers (use jnp.bfloat16 on
    v6e/v7x for ~2x MXU throughput and half the weight DMA; accumulation and
    bias/ReLU stay in f32).
    """
    B = state.shape[0]
    TM = min(tile_m, _round_up(B, 8))                  # multiple of 8 sublanes
    B_pad = _round_up(B, TM)

    x = state
    if B_pad != B:
        x = jnp.pad(x, ((0, B_pad - B), (0, 0)))

    # Weights in compute dtype (halves DMA/VMEM for bf16); biases kept f32.
    w = {i: params[f"w{i}"].astype(compute_dtype) for i in range(1, 6)}
    b = {i: params[f"b{i}"].astype(jnp.float32) for i in range(1, 6)}
    # Pad the last layer to a lane-dense 128-wide output (zeros in unused cols).
    w5 = jnp.pad(w[5], ((0, 0), (0, OUT_PAD - OUT_FEATURES)))
    b5 = jnp.pad(b[5], ((0, 0), (0, OUT_PAD - OUT_FEATURES)))

    grid = (B_pad // TM,)

    def pinned(shape):
        # Constant block index => weight/bias stays resident in VMEM across
        # grid steps (DMA'd once), only the batch tiles stream.
        return pl.BlockSpec(shape, lambda i: (0, 0))

    in_specs = [
        pl.BlockSpec((TM, IN_FEATURES), lambda i: (i, 0)),
        pinned((IN_FEATURES, HIDDEN)), pinned((1, HIDDEN)),
        pinned((HIDDEN, HIDDEN)), pinned((1, HIDDEN)),
        pinned((HIDDEN, HIDDEN)), pinned((1, HIDDEN)),
        pinned((HIDDEN, HIDDEN)), pinned((1, HIDDEN)),
        pinned((HIDDEN, OUT_PAD)), pinned((1, OUT_PAD)),
    ]
    out_specs = pl.BlockSpec((TM, OUT_PAD), lambda i: (i, 0))

    weight_bytes = sum(int(v.size) * v.dtype.itemsize for v in w.values()) \
        + sum(int(v.size) * v.dtype.itemsize for v in b.values())
    cost = pl.CostEstimate(
        flops=2 * B_pad * (IN_FEATURES * HIDDEN + 3 * HIDDEN * HIDDEN
                           + HIDDEN * OUT_PAD),
        transcendentals=0,
        bytes_accessed=B_pad * IN_FEATURES * 4 + B_pad * OUT_PAD * 4 + weight_bytes,
    )

    out = pl.pallas_call(
        _soft_q_kernel,
        out_shape=jax.ShapeDtypeStruct((B_pad, OUT_PAD), jnp.float32),
        grid=grid,
        in_specs=in_specs,
        out_specs=out_specs,
        compiler_params=pltpu.CompilerParams(
            dimension_semantics=("parallel",),
            vmem_limit_bytes=64 << 20),
        cost_estimate=cost,
    )(x,
      w[1], b[1], w[2], b[2], w[3], b[3], w[4], b[4], w5, b5)

    return out[:B, :OUT_FEATURES]


def init_params(key):
    """Kaiming-normal weights (std = sqrt(2 / fan_in)), zero biases.

    Stored as (in, out), i.e. the transpose of PyTorch's (out, in) layout,
    so the kernel computes y = x @ W + b directly.
    """
    dims = [(IN_FEATURES, HIDDEN),
            (HIDDEN, HIDDEN),
            (HIDDEN, HIDDEN),
            (HIDDEN, HIDDEN),
            (HIDDEN, OUT_FEATURES)]
    params = {}
    keys = jax.random.split(key, len(dims))
    for i, ((fan_in, fan_out), k) in enumerate(zip(dims, keys), start=1):
        std = (2.0 / fan_in) ** 0.5
        params[f"w{i}"] = std * jax.random.normal(k, (fan_in, fan_out), jnp.float32)
        params[f"b{i}"] = jnp.zeros((1, fan_out), jnp.float32)
    return params


def reference_forward(state, params, compute_dtype=jnp.float32):
    """Plain-JAX reference mirroring the kernel's casting behaviour."""
    ws = [params[f"w{i}"].astype(compute_dtype) for i in range(1, 6)]
    bs = [params[f"b{i}"].astype(jnp.float32) for i in range(1, 6)]
    h = state.astype(jnp.float32)
    # Layer 1 in f32 (kernel does the K=4 contraction as f32 VPU FMAs).
    h = jnp.maximum(h @ ws[0].astype(jnp.float32) + bs[0], 0.0)
    for i in range(1, 4):
        h = jnp.maximum(
            jnp.dot(h.astype(compute_dtype), ws[i],
                    preferred_element_type=jnp.float32) + bs[i], 0.0)
    return jnp.dot(h.astype(compute_dtype), ws[4],
                   preferred_element_type=jnp.float32) + bs[4]


if __name__ == "__main__":
    key = jax.random.PRNGKey(0)
    pkey, xkey = jax.random.split(key)
    params = init_params(pkey)

    # Primary small check: batch=8, f32 compute path, single tile.
    state = jax.random.normal(xkey, (8, IN_FEATURES), jnp.float32)
    out = jax.block_until_ready(soft_q_forward(state, params))
    ref = reference_forward(state, params)
    assert out.shape == (8, OUT_FEATURES)
    assert jnp.allclose(out, ref, atol=1e-4, rtol=1e-4), "f32 mismatch vs reference"

    # Multi-tile grid + batch padding check: B=40 with TM=16 -> grid=(3,), pad 40->48.
    state2 = jax.random.normal(jax.random.fold_in(xkey, 1),
                               (40, IN_FEATURES), jnp.float32)
    out2 = jax.block_until_ready(soft_q_forward(state2, params, tile_m=16))
    ref2 = reference_forward(state2, params)
    assert out2.shape == (40, OUT_FEATURES)
    assert jnp.allclose(out2, ref2, atol=1e-4, rtol=1e-4), "tiled f32 mismatch"

    # bf16 MXU fast path (v6e/v7x), compared against a bf16-mimicking reference.
    out3 = jax.block_until_ready(
        soft_q_forward(state2, params, compute_dtype=jnp.bfloat16, tile_m=16))
    ref3 = reference_forward(state2, params, compute_dtype=jnp.bfloat16)
    assert jnp.allclose(out3, ref3, atol=2e-3, rtol=2e-3), "bf16 mismatch"

    print("KERNEL_OK")
</pallas_src>

<mosaic_0001>
module attributes {stable_mosaic.version = 11 : i64} {
  func.func @_soft_q_kernel(%arg0: i32, %arg1: memref<8x4xf32, #tpu.memory_space<vmem>>, %arg2: memref<4x128xf32, #tpu.memory_space<vmem>>, %arg3: memref<1x128xf32, #tpu.memory_space<vmem>>, %arg4: memref<128x128xf32, #tpu.memory_space<vmem>>, %arg5: memref<1x128xf32, #tpu.memory_space<vmem>>, %arg6: memref<128x128xf32, #tpu.memory_space<vmem>>, %arg7: memref<1x128xf32, #tpu.memory_space<vmem>>, %arg8: memref<128x128xf32, #tpu.memory_space<vmem>>, %arg9: memref<1x128xf32, #tpu.memory_space<vmem>>, %arg10: memref<128x128xf32, #tpu.memory_space<vmem>>, %arg11: memref<1x128xf32, #tpu.memory_space<vmem>>, %arg12: memref<8x128xf32, #tpu.memory_space<vmem>>) attributes {dimension_semantics = [#tpu.dimension_semantics<parallel>], iteration_bounds = array<i64: 1>, scalar_prefetch = 0 : i64, scratch_operands = 0 : i64, tpu.core_type = #tpu.core_type<tc>, window_params = [{transform_indices = @transform_0, window_bounds = array<i64: 8, 4>}, {pipeline_mode = #tpu.pipeline_mode<synchronous>, transform_indices = @transform_1, window_bounds = array<i64: 4, 128>}, {pipeline_mode = #tpu.pipeline_mode<synchronous>, transform_indices = @transform_2, window_bounds = array<i64: 1, 128>}, {pipeline_mode = #tpu.pipeline_mode<synchronous>, transform_indices = @transform_3, window_bounds = array<i64: 128, 128>}, {pipeline_mode = #tpu.pipeline_mode<synchronous>, transform_indices = @transform_4, window_bounds = array<i64: 1, 128>}, {pipeline_mode = #tpu.pipeline_mode<synchronous>, transform_indices = @transform_5, window_bounds = array<i64: 128, 128>}, {pipeline_mode = #tpu.pipeline_mode<synchronous>, transform_indices = @transform_6, window_bounds = array<i64: 1, 128>}, {pipeline_mode = #tpu.pipeline_mode<synchronous>, transform_indices = @transform_7, window_bounds = array<i64: 128, 128>}, {pipeline_mode = #tpu.pipeline_mode<synchronous>, transform_indices = @transform_8, window_bounds = array<i64: 1, 128>}, {pipeline_mode = #tpu.pipeline_mode<synchronous>, transform_indices = @transform_9, window_bounds = array<i64: 128, 128>}, {pipeline_mode = #tpu.pipeline_mode<synchronous>, transform_indices = @transform_10, window_bounds = array<i64: 1, 128>}, {transform_indices = @transform_11, window_bounds = array<i64: 8, 128>}]} {
    %c0 = arith.constant 0 : index
    %c0_0 = arith.constant 0 : index
    %0 = vector.load %arg1[%c0, %c0_0] : memref<8x4xf32, #tpu.memory_space<vmem>>, vector<8x4xf32>
    %c0_1 = arith.constant 0 : index
    %c0_2 = arith.constant 0 : index
    %1 = vector.load %arg2[%c0_1, %c0_2] : memref<4x128xf32, #tpu.memory_space<vmem>>, vector<4x128xf32>
    %2 = vector.extract_strided_slice %0 {offsets = [0, 0], sizes = [8, 1], strides = [1, 1]} : vector<8x4xf32> to vector<8x1xf32>
    %3 = vector.extract_strided_slice %1 {offsets = [0, 0], sizes = [1, 128], strides = [1, 1]} : vector<4x128xf32> to vector<1x128xf32>
    %4 = vector.broadcast %2 : vector<8x1xf32> to vector<8x128xf32>
    %5 = vector.broadcast %3 : vector<1x128xf32> to vector<8x128xf32>
    %6 = arith.mulf %4, %5 : vector<8x128xf32>
    %7 = vector.extract_strided_slice %0 {offsets = [0, 1], sizes = [8, 1], strides = [1, 1]} : vector<8x4xf32> to vector<8x1xf32>
    %8 = vector.extract_strided_slice %1 {offsets = [1, 0], sizes = [1, 128], strides = [1, 1]} : vector<4x128xf32> to vector<1x128xf32>
    %9 = vector.broadcast %7 : vector<8x1xf32> to vector<8x128xf32>
    %10 = vector.broadcast %8 : vector<1x128xf32> to vector<8x128xf32>
    %11 = arith.mulf %9, %10 : vector<8x128xf32>
    %12 = arith.addf %6, %11 : vector<8x128xf32>
    %13 = vector.extract_strided_slice %0 {offsets = [0, 2], sizes = [8, 1], strides = [1, 1]} : vector<8x4xf32> to vector<8x1xf32>
    %14 = vector.extract_strided_slice %1 {offsets = [2, 0], sizes = [1, 128], strides = [1, 1]} : vector<4x128xf32> to vector<1x128xf32>
    %15 = vector.broadcast %13 : vector<8x1xf32> to vector<8x128xf32>
    %16 = vector.broadcast %14 : vector<1x128xf32> to vector<8x128xf32>
    %17 = arith.mulf %15, %16 : vector<8x128xf32>
    %18 = arith.addf %12, %17 : vector<8x128xf32>
    %19 = vector.extract_strided_slice %0 {offsets = [0, 3], sizes = [8, 1], strides = [1, 1]} : vector<8x4xf32> to vector<8x1xf32>
    %20 = vector.extract_strided_slice %1 {offsets = [3, 0], sizes = [1, 128], strides = [1, 1]} : vector<4x128xf32> to vector<1x128xf32>
    %21 = vector.broadcast %19 : vector<8x1xf32> to vector<8x128xf32>
    %22 = vector.broadcast %20 : vector<1x128xf32> to vector<8x128xf32>
    %23 = arith.mulf %21, %22 : vector<8x128xf32>
    %24 = arith.addf %18, %23 : vector<8x128xf32>
    %c0_3 = arith.constant 0 : index
    %c0_4 = arith.constant 0 : index
    %25 = vector.load %arg3[%c0_3, %c0_4] : memref<1x128xf32, #tpu.memory_space<vmem>>, vector<1x128xf32>
    %26 = vector.broadcast %25 : vector<1x128xf32> to vector<8x128xf32>
    %27 = arith.addf %24, %26 : vector<8x128xf32>
    %cst = arith.constant 0.000000e+00 : f32
    %28 = vector.broadcast %cst : f32 to vector<8x128xf32>
    %29 = arith.maximumf %27, %28 : vector<8x128xf32>
    %c0_5 = arith.constant 0 : index
    %c0_6 = arith.constant 0 : index
    %30 = vector.load %arg4[%c0_5, %c0_6] : memref<128x128xf32, #tpu.memory_space<vmem>>, vector<128x128xf32>
    %cst_7 = arith.constant dense<0.000000e+00> : vector<8x128xf32>
    %31 = tpu.matmul %29, %30, %cst_7 {dimension_numbers = #tpu.dot_dimension_numbers<[1], [0], [0], [1], [0, 0, 1, 1], [], []>} : vector<8x128xf32>, vector<128x128xf32>, vector<8x128xf32> -> vector<8x128xf32>
    %c0_8 = arith.constant 0 : index
    %c0_9 = arith.constant 0 : index
    %32 = vector.load %arg5[%c0_8, %c0_9] : memref<1x128xf32, #tpu.memory_space<vmem>>, vector<1x128xf32>
    %33 = vector.broadcast %32 : vector<1x128xf32> to vector<8x128xf32>
    %34 = arith.addf %31, %33 : vector<8x128xf32>
    %cst_10 = arith.constant 0.000000e+00 : f32
    %35 = vector.broadcast %cst_10 : f32 to vector<8x128xf32>
    %36 = arith.maximumf %34, %35 : vector<8x128xf32>
    %c0_11 = arith.constant 0 : index
    %c0_12 = arith.constant 0 : index
    %37 = vector.load %arg6[%c0_11, %c0_12] : memref<128x128xf32, #tpu.memory_space<vmem>>, vector<128x128xf32>
    %cst_13 = arith.constant dense<0.000000e+00> : vector<8x128xf32>
    %38 = tpu.matmul %36, %37, %cst_13 {dimension_numbers = #tpu.dot_dimension_numbers<[1], [0], [0], [1], [0, 0, 1, 1], [], []>} : vector<8x128xf32>, vector<128x128xf32>, vector<8x128xf32> -> vector<8x128xf32>
    %c0_14 = arith.constant 0 : index
    %c0_15 = arith.constant 0 : index
    %39 = vector.load %arg7[%c0_14, %c0_15] : memref<1x128xf32, #tpu.memory_space<vmem>>, vector<1x128xf32>
    %40 = vector.broadcast %39 : vector<1x128xf32> to vector<8x128xf32>
    %41 = arith.addf %38, %40 : vector<8x128xf32>
    %cst_16 = arith.constant 0.000000e+00 : f32
    %42 = vector.broadcast %cst_16 : f32 to vector<8x128xf32>
    %43 = arith.maximumf %41, %42 : vector<8x128xf32>
    %c0_17 = arith.constant 0 : index
    %c0_18 = arith.constant 0 : index
    %44 = vector.load %arg8[%c0_17, %c0_18] : memref<128x128xf32, #tpu.memory_space<vmem>>, vector<128x128xf32>
    %cst_19 = arith.constant dense<0.000000e+00> : vector<8x128xf32>
    %45 = tpu.matmul %43, %44, %cst_19 {dimension_numbers = #tpu.dot_dimension_numbers<[1], [0], [0], [1], [0, 0, 1, 1], [], []>} : vector<8x128xf32>, vector<128x128xf32>, vector<8x128xf32> -> vector<8x128xf32>
    %c0_20 = arith.constant 0 : index
    %c0_21 = arith.constant 0 : index
    %46 = vector.load %arg9[%c0_20, %c0_21] : memref<1x128xf32, #tpu.memory_space<vmem>>, vector<1x128xf32>
    %47 = vector.broadcast %46 : vector<1x128xf32> to vector<8x128xf32>
    %48 = arith.addf %45, %47 : vector<8x128xf32>
    %cst_22 = arith.constant 0.000000e+00 : f32
    %49 = vector.broadcast %cst_22 : f32 to vector<8x128xf32>
    %50 = arith.maximumf %48, %49 : vector<8x128xf32>
    %c0_23 = arith.constant 0 : index
    %c0_24 = arith.constant 0 : index
    %51 = vector.load %arg10[%c0_23, %c0_24] : memref<128x128xf32, #tpu.memory_space<vmem>>, vector<128x128xf32>
    %cst_25 = arith.constant dense<0.000000e+00> : vector<8x128xf32>
    %52 = tpu.matmul %50, %51, %cst_25 {dimension_numbers = #tpu.dot_dimension_numbers<[1], [0], [0], [1], [0, 0, 1, 1], [], []>} : vector<8x128xf32>, vector<128x128xf32>, vector<8x128xf32> -> vector<8x128xf32>
    %c0_26 = arith.constant 0 : index
    %c0_27 = arith.constant 0 : index
    %53 = vector.load %arg11[%c0_26, %c0_27] : memref<1x128xf32, #tpu.memory_space<vmem>>, vector<1x128xf32>
    %54 = vector.broadcast %53 : vector<1x128xf32> to vector<8x128xf32>
    %55 = arith.addf %52, %54 : vector<8x128xf32>
    %c0_28 = arith.constant 0 : index
    %c0_29 = arith.constant 0 : index
    %56 = vector.load %arg12[%c0_28, %c0_29] : memref<8x128xf32, #tpu.memory_space<vmem>>, vector<8x128xf32>
    tpu.vector_store %arg12[%c0_28, %c0_29], %55 {strides = array<i32>} : memref<8x128xf32, #tpu.memory_space<vmem>>, vector<8x128xf32>,
    return
  }
  func.func @transform_0(%arg0: i32) -> (i32, i32) {
    %c0_i32 = arith.constant 0 : i32
    %c0_i32_0 = arith.constant 0 : i32
    return %arg0, %c0_i32 : i32, i32
  }
  func.func @transform_1(%arg0: i32) -> (i32, i32) {
    %c0_i32 = arith.constant 0 : i32
    %c0_i32_0 = arith.constant 0 : i32
    %c0_i32_1 = arith.constant 0 : i32
    return %c0_i32, %c0_i32_0 : i32, i32
  }
  func.func @transform_2(%arg0: i32) -> (i32, i32) {
    %c0_i32 = arith.constant 0 : i32
    %c0_i32_0 = arith.constant 0 : i32
    %c0_i32_1 = arith.constant 0 : i32
    return %c0_i32, %c0_i32_0 : i32, i32
  }
  func.func @transform_3(%arg0: i32) -> (i32, i32) {
    %c0_i32 = arith.constant 0 : i32
    %c0_i32_0 = arith.constant 0 : i32
    %c0_i32_1 = arith.constant 0 : i32
    return %c0_i32, %c0_i32_0 : i32, i32
  }
  func.func @transform_4(%arg0: i32) -> (i32, i32) {
    %c0_i32 = arith.constant 0 : i32
    %c0_i32_0 = arith.constant 0 : i32
    %c0_i32_1 = arith.constant 0 : i32
    return %c0_i32, %c0_i32_0 : i32, i32
  }
  func.func @transform_5(%arg0: i32) -> (i32, i32) {
    %c0_i32 = arith.constant 0 : i32
    %c0_i32_0 = arith.constant 0 : i32
    %c0_i32_1 = arith.constant 0 : i32
    return %c0_i32, %c0_i32_0 : i32, i32
  }
  func.func @transform_6(%arg0: i32) -> (i32, i32) {
    %c0_i32 = arith.constant 0 : i32
    %c0_i32_0 = arith.constant 0 : i32
    %c0_i32_1 = arith.constant 0 : i32
    return %c0_i32, %c0_i32_0 : i32, i32
  }
  func.func @transform_7(%arg0: i32) -> (i32, i32) {
    %c0_i32 = arith.constant 0 : i32
    %c0_i32_0 = arith.constant 0 : i32
    %c0_i32_1 = arith.constant 0 : i32
    return %c0_i32, %c0_i32_0 : i32, i32
  }
  func.func @transform_8(%arg0: i32) -> (i32, i32) {
    %c0_i32 = arith.constant 0 : i32
    %c0_i32_0 = arith.constant 0 : i32
    %c0_i32_1 = arith.constant 0 : i32
    return %c0_i32, %c0_i32_0 : i32, i32
  }
  func.func @transform_9(%arg0: i32) -> (i32, i32) {
    %c0_i32 = arith.constant 0 : i32
    %c0_i32_0 = arith.constant 0 : i32
    %c0_i32_1 = arith.constant 0 : i32
    return %c0_i32, %c0_i32_0 : i32, i32
  }
  func.func @transform_10(%arg0: i32) -> (i32, i32) {
    %c0_i32 = arith.constant 0 : i32
    %c0_i32_0 = arith.constant 0 : i32
    %c0_i32_1 = arith.constant 0 : i32
    return %c0_i32, %c0_i32_0 : i32, i32
  }
  func.func @transform_11(%arg0: i32) -> (i32, i32) {
    %c0_i32 = arith.constant 0 : i32
    %c0_i32_0 = arith.constant 0 : i32
    return %arg0, %c0_i32 : i32, i32
  }
}

</mosaic_0001>

<llo_original>
// kernel: soft_q_forward.1
$region0: #{soft_q_forward.1}
  #allocation0 [shape = 'u32[]', space=smem, size = 0x4, offset = 0x4, fixed_abs, tag = 'smem constant byte address 0x4 - core index']
  #allocation1 [shape = 'u32[144,128]{1,0:T(1,128)}', space=vmem, size = 0x12000, scoped, tag = 'internal scratch']
  %s0 = inlined_call_operand.vmem [shape: f32[8,4], index: 0, kind: input, shape index: {}]
  %s1 = inlined_call_operand.vmem [shape: f32[4,128], index: 1, kind: input, shape index: {}]
  %s2 = inlined_call_operand.vmem [shape: f32[1,128], index: 2, kind: input, shape index: {}]
  %s3 = inlined_call_operand.vmem [shape: f32[128,128], index: 3, kind: input, shape index: {}]
  %s4 = inlined_call_operand.vmem [shape: f32[1,128], index: 4, kind: input, shape index: {}]
  %s5 = inlined_call_operand.vmem [shape: f32[128,128], index: 5, kind: input, shape index: {}]
  %s6 = inlined_call_operand.vmem [shape: f32[1,128], index: 6, kind: input, shape index: {}]
  %s7 = inlined_call_operand.vmem [shape: f32[128,128], index: 7, kind: input, shape index: {}]
  %s8 = inlined_call_operand.vmem [shape: f32[1,128], index: 8, kind: input, shape index: {}]
  %s9 = inlined_call_operand.vmem [shape: f32[128,128], index: 9, kind: input, shape index: {}]
  %s10 = inlined_call_operand.vmem [shape: f32[1,128], index: 10, kind: input, shape index: {}]
  %s11 = inlined_call_operand.vmem [shape: f32[8,128], index: 11, kind: output, shape index: {}]
  %s12 = sld [smem:[#allocation0]]
  $region54: #{soft_q_forward.1} parent=0
    _
  %s14 = ssub.s32 1, %s12
  %s15 = scalar_select 0, %s14, %s12
  // Predicated region
  $region2: #{soft_q_forward.1} parent=0 // pred_check
    _
  $region3: #{soft_q_forward.1} parent=0 // pred_check_branch
    %17 = sbr.rel (0) target = $region5
  $region4: #{soft_q_forward.1} parent=0 // pred_region
    _
  $region5: #{soft_q_forward.1} parent=0 // pred_fallthru
    _
  // Predicated region
  $region6: #{soft_q_forward.1} parent=0 // pred_check
    _
  $region7: #{soft_q_forward.1} parent=0 // pred_check_branch
    %19 = sbr.rel (0) target = $region9
  $region8: #{soft_q_forward.1} parent=0 // pred_region
    _
  $region9: #{soft_q_forward.1} parent=0 // pred_fallthru
    _
  // Predicated region
  $region10: #{soft_q_forward.1} parent=0 // pred_check
    _
  $region11: #{soft_q_forward.1} parent=0 // pred_check_branch
    %21 = sbr.rel (0) target = $region13
  $region12: #{soft_q_forward.1} parent=0 // pred_region
    _
  $region13: #{soft_q_forward.1} parent=0 // pred_fallthru
    _
  // Predicated region
  $region14: #{soft_q_forward.1} parent=0 // pred_check
    _
  $region15: #{soft_q_forward.1} parent=0 // pred_check_branch
    %23 = sbr.rel (0) target = $region17
  $region16: #{soft_q_forward.1} parent=0 // pred_region
    _
  $region17: #{soft_q_forward.1} parent=0 // pred_fallthru
    _
  // Predicated region
  $region18: #{soft_q_forward.1} parent=0 // pred_check
    _
  $region19: #{soft_q_forward.1} parent=0 // pred_check_branch
    %25 = sbr.rel (0) target = $region21
  $region20: #{soft_q_forward.1} parent=0 // pred_region
    _
  $region21: #{soft_q_forward.1} parent=0 // pred_fallthru
    _
  // Predicated region
  $region22: #{soft_q_forward.1} parent=0 // pred_check
    _
  $region23: #{soft_q_forward.1} parent=0 // pred_check_branch
    %27 = sbr.rel (0) target = $region25
  $region24: #{soft_q_forward.1} parent=0 // pred_region
    _
  $region25: #{soft_q_forward.1} parent=0 // pred_fallthru
    _
  // Predicated region
  $region26: #{soft_q_forward.1} parent=0 // pred_check
    _
  $region27: #{soft_q_forward.1} parent=0 // pred_check_branch
    %29 = sbr.rel (0) target = $region29
  $region28: #{soft_q_forward.1} parent=0 // pred_region
    _
  $region29: #{soft_q_forward.1} parent=0 // pred_fallthru
    _
  // Predicated region
  $region30: #{soft_q_forward.1} parent=0 // pred_check
    _
  $region31: #{soft_q_forward.1} parent=0 // pred_check_branch
    %31 = sbr.rel (0) target = $region33
  $region32: #{soft_q_forward.1} parent=0 // pred_region
    _
  $region33: #{soft_q_forward.1} parent=0 // pred_fallthru
    _
  // Predicated region
  $region34: #{soft_q_forward.1} parent=0 // pred_check
    _
  $region35: #{soft_q_forward.1} parent=0 // pred_check_branch
    %33 = sbr.rel (0) target = $region37
  $region36: #{soft_q_forward.1} parent=0 // pred_region
    _
  $region37: #{soft_q_forward.1} parent=0 // pred_fallthru
    _
  // Predicated region
  $region38: #{soft_q_forward.1} parent=0 // pred_check
    _
  $region39: #{soft_q_forward.1} parent=0 // pred_check_branch
    %35 = sbr.rel (0) target = $region41
  $region40: #{soft_q_forward.1} parent=0 // pred_region
    _
  $region41: #{soft_q_forward.1} parent=0 // pred_fallthru
    _
  // Predicated region
  $region42: #{soft_q_forward.1} parent=0 // pred_check
    _
  $region43: #{soft_q_forward.1} parent=0 // pred_check_branch
    %37 = sbr.rel (0) target = $region45
  $region44: #{soft_q_forward.1} parent=0 // pred_region
    _
  $region45: #{soft_q_forward.1} parent=0 // pred_fallthru
    _
  %v38 = vld [vmem:[%s0] sm:$0xff]
  %v39 = vld [vmem:[%s1] sm:$0xf]
  %41 = vset.pattern.permute.xlu0 0
  %42 = vperm.xlu0 %41, %v38
  %v43 = vpop.permute.xlu0 %42
  %v45 = vlaneseq
  %v46 = vshrl.u32 %v45, 7
  %v47 = vsub.s32 0, %v46
  %v48 = vrot.slane %v39, %v47
  %v49 = vmul.f32 %v43, %v48
  %50 = vset.pattern.permute.xlu0 1
  %51 = vperm.xlu0 %50, %v38
  %v52 = vpop.permute.xlu0 %51
  %v54 = vlaneseq
  %v55 = vshrl.u32 %v54, 7
  %v56 = vsub.s32 1, %v55
  %v57 = vrot.slane %v39, %v56
  %v58 = vmul.f32 %v52, %v57
  %v59 = vadd.f32 %v49, %v58
  %60 = vset.pattern.permute.xlu0 2
  %61 = vperm.xlu0 %60, %v38
  %v62 = vpop.permute.xlu0 %61
  %v64 = vlaneseq
  %v65 = vshrl.u32 %v64, 7
  %v66 = vsub.s32 2, %v65
  %v67 = vrot.slane %v39, %v66
  %v68 = vmul.f32 %v62, %v67
  %v69 = vadd.f32 %v59, %v68
  %70 = vset.pattern.permute.xlu0 3
  %71 = vperm.xlu0 %70, %v38
  %v72 = vpop.permute.xlu0 %71
  %v74 = vlaneseq
  %v75 = vshrl.u32 %v74, 7
  %v76 = vsub.s32 3, %v75
  %v77 = vrot.slane %v39, %v76
  %v78 = vmul.f32 %v72, %v77
  %v79 = vadd.f32 %v69, %v78
  %v80 = vld [vmem:[%s2] sm:$0x1]
  %v82 = vlaneseq
  %v83 = vshrl.u32 %v82, 7
  %v84 = vsub.s32 0, %v83
  %v85 = vrot.slane %v80, %v84
  %v87 = vadd.f32 %v79, %v85
  %v88 = vmax.f32 %v87, 0.0
  %v89 = vld [vmem:[%s3] sm:$0xff]
  %v90 = vld [vmem:[%s3 + $0x8] sm:$0xff]
  %v91 = vld [vmem:[%s3 + $0x10] sm:$0xff]
  %v92 = vld [vmem:[%s3 + $0x18] sm:$0xff]
  %v93 = vld [vmem:[%s3 + $0x20] sm:$0xff]
  %v94 = vld [vmem:[%s3 + $0x28] sm:$0xff]
  %v95 = vld [vmem:[%s3 + $0x30] sm:$0xff]
  %v96 = vld [vmem:[%s3 + $0x38] sm:$0xff]
  %v97 = vld [vmem:[%s3 + $0x40] sm:$0xff]
  %v98 = vld [vmem:[%s3 + $0x48] sm:$0xff]
  %v99 = vld [vmem:[%s3 + $0x50] sm:$0xff]
  %v100 = vld [vmem:[%s3 + $0x58] sm:$0xff]
  %v101 = vld [vmem:[%s3 + $0x60] sm:$0xff]
  %v102 = vld [vmem:[%s3 + $0x68] sm:$0xff]
  %v103 = vld [vmem:[%s3 + $0x70] sm:$0xff]
  %v104 = vld [vmem:[%s3 + $0x78] sm:$0xff]
  %v105 = vld [vmem:[%s4] sm:$0x1]
  %v107 = vlaneseq
  %v108 = vshrl.u32 %v107, 7
  %v109 = vsub.s32 0, %v108
  %v110 = vrot.slane %v105, %v109
  %112 = vmatprep.subr.mxu0 0.0
  %113 = vmatpush1.msra.mxu0 %v104
  %114 = vmatprep.subr.mxu0 0.0
  %115 = vmatpush1.msra.mxu0 %v103
  %116 = vmatprep.subr.mxu0 0.0
  %117 = vmatpush1.msra.mxu0 %v102
  %118 = vmatprep.subr.mxu0 0.0
  %119 = vmatpush1.msra.mxu0 %v101
  %120 = vmatprep.subr.mxu0 0.0
  %121 = vmatpush1.msra.mxu0 %v100
  %122 = vmatprep.subr.mxu0 0.0
  %123 = vmatpush1.msra.mxu0 %v99
  %124 = vmatprep.subr.mxu0 0.0
  %125 = vmatpush1.msra.mxu0 %v98
  %126 = vmatprep.subr.mxu0 0.0
  %127 = vmatpush1.msra.mxu0 %v97
  %128 = vmatprep.subr.mxu0 0.0
  %129 = vmatpush1.msra.mxu0 %v96
  %130 = vmatprep.subr.mxu0 0.0
  %131 = vmatpush1.msra.mxu0 %v95
  %132 = vmatprep.subr.mxu0 0.0
  %133 = vmatpush1.msra.mxu0 %v94
  %134 = vmatprep.subr.mxu0 0.0
  %135 = vmatpush1.msra.mxu0 %v93
  %136 = vmatprep.subr.mxu0 0.0
  %137 = vmatpush1.msra.mxu0 %v92
  %138 = vmatprep.subr.mxu0 0.0
  %139 = vmatpush1.msra.mxu0 %v91
  %140 = vmatprep.subr.mxu0 0.0
  %141 = vmatpush1.msra.mxu0 %v90
  %142 = vmatprep.subr.mxu0 0.0
  %143 = vmatpush1.msra.mxu0 %v89
  %144 = vmatprep.subr.mxu0 0.0
  %145 = vmatpush2.msra.mxu0 0.0
  %146 = vmatprep.subr.mxu0 0.0
  %147 = vmatpush2.msra.mxu0 0.0
  %148 = vmatprep.subr.mxu0 0.0
  %149 = vmatpush2.msra.mxu0 0.0
  %150 = vmatprep.subr.mxu0 0.0
  %151 = vmatpush2.msra.mxu0 0.0
  %152 = vmatprep.subr.mxu0 0.0
  %153 = vmatpush2.msra.mxu0 0.0
  %154 = vmatprep.subr.mxu0 0.0
  %155 = vmatpush2.msra.mxu0 0.0
  %156 = vmatprep.subr.mxu0 0.0
  %157 = vmatpush2.msra.mxu0 0.0
  %158 = vmatprep.subr.mxu0 0.0
  %159 = vmatpush2.msra.mxu0 0.0
  %160 = vmatprep.subr.mxu0 0.0
  %161 = vmatpush2.msra.mxu0 0.0
  %162 = vmatprep.subr.mxu0 0.0
  %163 = vmatpush2.msra.mxu0 0.0
  %164 = vmatprep.subr.mxu0 0.0
  %165 = vmatpush2.msra.mxu0 0.0
  %166 = vmatprep.subr.mxu0 0.0
  %167 = vmatpush2.msra.mxu0 0.0
  %168 = vmatprep.subr.mxu0 0.0
  %169 = vmatpush2.msra.mxu0 0.0
  %170 = vmatprep.subr.mxu0 0.0
  %171 = vmatpush2.msra.mxu0 0.0
  %172 = vmatprep.subr.mxu0 0.0
  %173 = vmatpush2.msra.mxu0 0.0
  %174 = vmatprep.subr.mxu0 0.0
  %175 = vmatpush2.msra.mxu0 0.0
  %176 = vmatprep.mubr.f32.mxu0 0.0
  %177 = vmatmul.mubr.f32.gmra.mxu0 %v88
  %v178 = vpop.f32.mrf.mxu0
  %v179 = vadd.f32 %v110, %v178
  %v180 = vpop.f32.mrf.mxu0
  %181 = vdwg.mxu0
  %v182 = vmax.f32 %v179, 0.0
  %v183 = vld [vmem:[%s5] sm:$0xff]
  %v184 = vld [vmem:[%s5 + $0x8] sm:$0xff]
  %v185 = vld [vmem:[%s5 + $0x10] sm:$0xff]
  %v186 = vld [vmem:[%s5 + $0x18] sm:$0xff]
  %v187 = vld [vmem:[%s5 + $0x20] sm:$0xff]
  %v188 = vld [vmem:[%s5 + $0x28] sm:$0xff]
  %v189 = vld [vmem:[%s5 + $0x30] sm:$0xff]
  %v190 = vld [vmem:[%s5 + $0x38] sm:$0xff]
  %v191 = vld [vmem:[%s5 + $0x40] sm:$0xff]
  %v192 = vld [vmem:[%s5 + $0x48] sm:$0xff]
  %v193 = vld [vmem:[%s5 + $0x50] sm:$0xff]
  %v194 = vld [vmem:[%s5 + $0x58] sm:$0xff]
  %v195 = vld [vmem:[%s5 + $0x60] sm:$0xff]
  %v196 = vld [vmem:[%s5 + $0x68] sm:$0xff]
  %v197 = vld [vmem:[%s5 + $0x70] sm:$0xff]
  %v198 = vld [vmem:[%s5 + $0x78] sm:$0xff]
  %v199 = vld [vmem:[%s6] sm:$0x1]
  %v201 = vlaneseq
  %v202 = vshrl.u32 %v201, 7
  %v203 = vsub.s32 0, %v202
  %v204 = vrot.slane %v199, %v203
  %206 = vmatprep.subr.mxu0 0.0
  %207 = vmatpush1.msra.mxu0 %v198
  %208 = vmatprep.subr.mxu0 0.0
  %209 = vmatpush1.msra.mxu0 %v197
  %210 = vmatprep.subr.mxu0 0.0
  %211 = vmatpush1.msra.mxu0 %v196
  %212 = vmatprep.subr.mxu0 0.0
  %213 = vmatpush1.msra.mxu0 %v195
  %214 = vmatprep.subr.mxu0 0.0
  %215 = vmatpush1.msra.mxu0 %v194
  %216 = vmatprep.subr.mxu0 0.0
  %217 = vmatpush1.msra.mxu0 %v193
  %218 = vmatprep.subr.mxu0 0.0
  %219 = vmatpush1.msra.mxu0 %v192
  %220 = vmatprep.subr.mxu0 0.0
  %221 = vmatpush1.msra.mxu0 %v191
  %222 = vmatprep.subr.mxu0 0.0
  %223 = vmatpush1.msra.mxu0 %v190
  %224 = vmatprep.subr.mxu0 0.0
  %225 = vmatpush1.msra.mxu0 %v189
  %226 = vmatprep.subr.mxu0 0.0
  %227 = vmatpush1.msra.mxu0 %v188
  %228 = vmatprep.subr.mxu0 0.0
  %229 = vmatpush1.msra.mxu0 %v187
  %230 = vmatprep.subr.mxu0 0.0
  %231 = vmatpush1.msra.mxu0 %v186
  %232 = vmatprep.subr.mxu0 0.0
  %233 = vmatpush1.msra.mxu0 %v185
  %234 = vmatprep.subr.mxu0 0.0
  %235 = vmatpush1.msra.mxu0 %v184
  %236 = vmatprep.subr.mxu0 0.0
  %237 = vmatpush1.msra.mxu0 %v183
  %238 = vmatprep.subr.mxu0 0.0
  %239 = vmatpush2.msra.mxu0 0.0
  %240 = vmatprep.subr.mxu0 0.0
  %241 = vmatpush2.msra.mxu0 0.0
  %242 = vmatprep.subr.mxu0 0.0
  %243 = vmatpush2.msra.mxu0 0.0
  %244 = vmatprep.subr.mxu0 0.0
  %245 = vmatpush2.msra.mxu0 0.0
  %246 = vmatprep.subr.mxu0 0.0
  %247 = vmatpush2.msra.mxu0 0.0
  %248 = vmatprep.subr.mxu0 0.0
  %249 = vmatpush2.msra.mxu0 0.0
  %250 = vmatprep.subr.mxu0 0.0
  %251 = vmatpush2.msra.mxu0 0.0
  %252 = vmatprep.subr.mxu0 0.0
  %253 = vmatpush2.msra.mxu0 0.0
  %254 = vmatprep.subr.mxu0 0.0
  %255 = vmatpush2.msra.mxu0 0.0
  %256 = vmatprep.subr.mxu0 0.0
  %257 = vmatpush2.msra.mxu0 0.0
  %258 = vmatprep.subr.mxu0 0.0
  %259 = vmatpush2.msra.mxu0 0.0
  %260 = vmatprep.subr.mxu0 0.0
  %261 = vmatpush2.msra.mxu0 0.0
  %262 = vmatprep.subr.mxu0 0.0
  %263 = vmatpush2.msra.mxu0 0.0
  %264 = vmatprep.subr.mxu0 0.0
  %265 = vmatpush2.msra.mxu0 0.0
  %266 = vmatprep.subr.mxu0 0.0
  %267 = vmatpush2.msra.mxu0 0.0
  %268 = vmatprep.subr.mxu0 0.0
  %269 = vmatpush2.msra.mxu0 0.0
  %270 = vmatprep.mubr.f32.mxu0 0.0
  %271 = vmatmul.mubr.f32.gmra.mxu0 %v182
  %v272 = vpop.f32.mrf.mxu0
  %v273 = vadd.f32 %v204, %v272
  %v274 = vpop.f32.mrf.mxu0
  %275 = vdwg.mxu0
  %v276 = vmax.f32 %v273, 0.0
  %v277 = vld [vmem:[%s7] sm:$0xff]
  %v278 = vld [vmem:[%s7 + $0x8] sm:$0xff]
  %v279 = vld [vmem:[%s7 + $0x10] sm:$0xff]
  %v280 = vld [vmem:[%s7 + $0x18] sm:$0xff]
  %v281 = vld [vmem:[%s7 + $0x20] sm:$0xff]
  %v282 = vld [vmem:[%s7 + $0x28] sm:$0xff]
  %v283 = vld [vmem:[%s7 + $0x30] sm:$0xff]
  %v284 = vld [vmem:[%s7 + $0x38] sm:$0xff]
  %v285 = vld [vmem:[%s7 + $0x40] sm:$0xff]
  %v286 = vld [vmem:[%s7 + $0x48] sm:$0xff]
  %v287 = vld [vmem:[%s7 + $0x50] sm:$0xff]
  %v288 = vld [vmem:[%s7 + $0x58] sm:$0xff]
  %v289 = vld [vmem:[%s7 + $0x60] sm:$0xff]
  %v290 = vld [vmem:[%s7 + $0x68] sm:$0xff]
  %v291 = vld [vmem:[%s7 + $0x70] sm:$0xff]
  %v292 = vld [vmem:[%s7 + $0x78] sm:$0xff]
  %v293 = vld [vmem:[%s8] sm:$0x1]
  %v295 = vlaneseq
  %v296 = vshrl.u32 %v295, 7
  %v297 = vsub.s32 0, %v296
  %v298 = vrot.slane %v293, %v297
  %300 = vmatprep.subr.mxu0 0.0
  %301 = vmatpush1.msra.mxu0 %v292
  %302 = vmatprep.subr.mxu0 0.0
  %303 = vmatpush1.msra.mxu0 %v291
  %304 = vmatprep.subr.mxu0 0.0
  %305 = vmatpush1.msra.mxu0 %v290
  %306 = vmatprep.subr.mxu0 0.0
  %307 = vmatpush1.msra.mxu0 %v289
  %308 = vmatprep.subr.mxu0 0.0
  %309 = vmatpush1.msra.mxu0 %v288
  %310 = vmatprep.subr.mxu0 0.0
  %311 = vmatpush1.msra.mxu0 %v287
  %312 = vmatprep.subr.mxu0 0.0
  %313 = vmatpush1.msra.mxu0 %v286
  %314 = vmatprep.subr.mxu0 0.0
  %315 = vmatpush1.msra.mxu0 %v285
  %316 = vmatprep.subr.mxu0 0.0
  %317 = vmatpush1.msra.mxu0 %v284
  %318 = vmatprep.subr.mxu0 0.0
  %319 = vmatpush1.msra.mxu0 %v283
  %320 = vmatprep.subr.mxu0 0.0
  %321 = vmatpush1.msra.mxu0 %v282
  %322 = vmatprep.subr.mxu0 0.0
  %323 = vmatpush1.msra.mxu0 %v281
  %324 = vmatprep.subr.mxu0 0.0
  %325 = vmatpush1.msra.mxu0 %v280
  %326 = vmatprep.subr.mxu0 0.0
  %327 = vmatpush1.msra.mxu0 %v279
  %328 = vmatprep.subr.mxu0 0.0
  %329 = vmatpush1.msra.mxu0 %v278
  %330 = vmatprep.subr.mxu0 0.0
  %331 = vmatpush1.msra.mxu0 %v277
  %332 = vmatprep.subr.mxu0 0.0
  %333 = vmatpush2.msra.mxu0 0.0
  %334 = vmatprep.subr.mxu0 0.0
  %335 = vmatpush2.msra.mxu0 0.0
  %336 = vmatprep.subr.mxu0 0.0
  %337 = vmatpush2.msra.mxu0 0.0
  %338 = vmatprep.subr.mxu0 0.0
  %339 = vmatpush2.msra.mxu0 0.0
  %340 = vmatprep.subr.mxu0 0.0
  %341 = vmatpush2.msra.mxu0 0.0
  %342 = vmatprep.subr.mxu0 0.0
  %343 = vmatpush2.msra.mxu0 0.0
  %344 = vmatprep.subr.mxu0 0.0
  %345 = vmatpush2.msra.mxu0 0.0
  %346 = vmatprep.subr.mxu0 0.0
  %347 = vmatpush2.msra.mxu0 0.0
  %348 = vmatprep.subr.mxu0 0.0
  %349 = vmatpush2.msra.mxu0 0.0
  %350 = vmatprep.subr.mxu0 0.0
  %351 = vmatpush2.msra.mxu0 0.0
  %352 = vmatprep.subr.mxu0 0.0
  %353 = vmatpush2.msra.mxu0 0.0
  %354 = vmatprep.subr.mxu0 0.0
  %355 = vmatpush2.msra.mxu0 0.0
  %356 = vmatprep.subr.mxu0 0.0
  %357 = vmatpush2.msra.mxu0 0.0
  %358 = vmatprep.subr.mxu0 0.0
  %359 = vmatpush2.msra.mxu0 0.0
  %360 = vmatprep.subr.mxu0 0.0
  %361 = vmatpush2.msra.mxu0 0.0
  %362 = vmatprep.subr.mxu0 0.0
  %363 = vmatpush2.msra.mxu0 0.0
  %364 = vmatprep.mubr.f32.mxu0 0.0
  %365 = vmatmul.mubr.f32.gmra.mxu0 %v276
  %v366 = vpop.f32.mrf.mxu0
  %v367 = vadd.f32 %v298, %v366
  %v368 = vpop.f32.mrf.mxu0
  %369 = vdwg.mxu0
  %v370 = vmax.f32 %v367, 0.0
  %v371 = vld [vmem:[%s9] sm:$0xff]
  %v372 = vld [vmem:[%s9 + $0x8] sm:$0xff]
  %v373 = vld [vmem:[%s9 + $0x10] sm:$0xff]
  %v374 = vld [vmem:[%s9 + $0x18] sm:$0xff]
  %v375 = vld [vmem:[%s9 + $0x20] sm:$0xff]
  %v376 = vld [vmem:[%s9 + $0x28] sm:$0xff]
  %v377 = vld [vmem:[%s9 + $0x30] sm:$0xff]
  %v378 = vld [vmem:[%s9 + $0x38] sm:$0xff]
  %v379 = vld [vmem:[%s9 + $0x40] sm:$0xff]
  %v380 = vld [vmem:[%s9 + $0x48] sm:$0xff]
  %v381 = vld [vmem:[%s9 + $0x50] sm:$0xff]
  %v382 = vld [vmem:[%s9 + $0x58] sm:$0xff]
  %v383 = vld [vmem:[%s9 + $0x60] sm:$0xff]
  %v384 = vld [vmem:[%s9 + $0x68] sm:$0xff]
  %v385 = vld [vmem:[%s9 + $0x70] sm:$0xff]
  %v386 = vld [vmem:[%s9 + $0x78] sm:$0xff]
  %v387 = vld [vmem:[%s10] sm:$0x1]
  %v389 = vlaneseq
  %v390 = vshrl.u32 %v389, 7
  %v391 = vsub.s32 0, %v390
  %v392 = vrot.slane %v387, %v391
  %394 = vmatprep.subr.mxu0 0.0
  %395 = vmatpush1.msra.mxu0 %v386
  %396 = vmatprep.subr.mxu0 0.0
  %397 = vmatpush1.msra.mxu0 %v385
  %398 = vmatprep.subr.mxu0 0.0
  %399 = vmatpush1.msra.mxu0 %v384
  %400 = vmatprep.subr.mxu0 0.0
  %401 = vmatpush1.msra.mxu0 %v383
  %402 = vmatprep.subr.mxu0 0.0
  %403 = vmatpush1.msra.mxu0 %v382
  %404 = vmatprep.subr.mxu0 0.0
  %405 = vmatpush1.msra.mxu0 %v381
  %406 = vmatprep.subr.mxu0 0.0
  %407 = vmatpush1.msra.mxu0 %v380
  %408 = vmatprep.subr.mxu0 0.0
  %409 = vmatpush1.msra.mxu0 %v379
  %410 = vmatprep.subr.mxu0 0.0
  %411 = vmatpush1.msra.mxu0 %v378
  %412 = vmatprep.subr.mxu0 0.0
  %413 = vmatpush1.msra.mxu0 %v377
  %414 = vmatprep.subr.mxu0 0.0
  %415 = vmatpush1.msra.mxu0 %v376
  %416 = vmatprep.subr.mxu0 0.0
  %417 = vmatpush1.msra.mxu0 %v375
  %418 = vmatprep.subr.mxu0 0.0
  %419 = vmatpush1.msra.mxu0 %v374
  %420 = vmatprep.subr.mxu0 0.0
  %421 = vmatpush1.msra.mxu0 %v373
  %422 = vmatprep.subr.mxu0 0.0
  %423 = vmatpush1.msra.mxu0 %v372
  %424 = vmatprep.subr.mxu0 0.0
  %425 = vmatpush1.msra.mxu0 %v371
  %426 = vmatprep.subr.mxu0 0.0
  %427 = vmatpush2.msra.mxu0 0.0
  %428 = vmatprep.subr.mxu0 0.0
  %429 = vmatpush2.msra.mxu0 0.0
  %430 = vmatprep.subr.mxu0 0.0
  %431 = vmatpush2.msra.mxu0 0.0
  %432 = vmatprep.subr.mxu0 0.0
  %433 = vmatpush2.msra.mxu0 0.0
  %434 = vmatprep.subr.mxu0 0.0
  %435 = vmatpush2.msra.mxu0 0.0
  %436 = vmatprep.subr.mxu0 0.0
  %437 = vmatpush2.msra.mxu0 0.0
  %438 = vmatprep.subr.mxu0 0.0
  %439 = vmatpush2.msra.mxu0 0.0
  %440 = vmatprep.subr.mxu0 0.0
  %441 = vmatpush2.msra.mxu0 0.0
  %442 = vmatprep.subr.mxu0 0.0
  %443 = vmatpush2.msra.mxu0 0.0
  %444 = vmatprep.subr.mxu0 0.0
  %445 = vmatpush2.msra.mxu0 0.0
  %446 = vmatprep.subr.mxu0 0.0
  %447 = vmatpush2.msra.mxu0 0.0
  %448 = vmatprep.subr.mxu0 0.0
  %449 = vmatpush2.msra.mxu0 0.0
  %450 = vmatprep.subr.mxu0 0.0
  %451 = vmatpush2.msra.mxu0 0.0
  %452 = vmatprep.subr.mxu0 0.0
  %453 = vmatpush2.msra.mxu0 0.0
  %454 = vmatprep.subr.mxu0 0.0
  %455 = vmatpush2.msra.mxu0 0.0
  %456 = vmatprep.subr.mxu0 0.0
  %457 = vmatpush2.msra.mxu0 0.0
  %458 = vmatprep.mubr.f32.mxu0 0.0
  %459 = vmatmul.mubr.f32.gmra.mxu0 %v370
  %v460 = vpop.f32.mrf.mxu0
  %v461 = vadd.f32 %v392, %v460
  %v462 = vpop.f32.mrf.mxu0
  %463 = vdwg.mxu0
  %464 = vst [vmem:[%s11] sm:$0xff] %v461
  // Predicated region
  $region46: #{soft_q_forward.1} parent=0 // pred_check
    _
  $region47: #{soft_q_forward.1} parent=0 // pred_check_branch
    %466 = sbr.rel (0) target = $region49
  $region48: #{soft_q_forward.1} parent=0 // pred_region
    _
  $region49: #{soft_q_forward.1} parent=0 // pred_fallthru
    _
  // Predicated region
  $region50: #{soft_q_forward.1} parent=0 // pred_check
    _
  $region51: #{soft_q_forward.1} parent=0 // pred_check_branch
    %468 = sbr.rel (0) target = $region53
  $region52: #{soft_q_forward.1} parent=0 // pred_region
    _
  $region53: #{soft_q_forward.1} parent=0 // pred_fallthru
    _

</llo_original>
